<compile_context>
chip_gen: v7x
topology: tpu7x:2x2x1
jax: 0.10.0
libtpu: 0.0.40
codegen_flags: <defaults>
</compile_context>

<pallas_src>
import functools

import jax
import jax.numpy as jnp
from jax.experimental import pallas as pl
from jax.experimental.pallas import tpu as pltpu


def _round_up(a, b):
    return ((a + b - 1) // b) * b


def _fc_layer_kernel(x_ref, w_ref, p_ref, o_ref, acc_ref, *, eps, out_dim, out_pad):
    # x_ref:   (tm, tk)          native dtype
    # w_ref:   (tk, out_pad)     native dtype (already transposed, zero-padded)
    # p_ref:   (3, out_pad)      row 0 = bias, row 1 = gamma, row 2 = beta
    # o_ref:   (tm, out_pad)
    # acc_ref: (tm, out_pad)     f32 accumulator scratch (persists over k axis)
    k = pl.program_id(1)

    @pl.when(k == 0)
    def _():
        acc_ref[...] = jnp.zeros_like(acc_ref)

    # MXU consumes native dtype, accumulates in f32.
    acc_ref[...] += jnp.dot(x_ref[...], w_ref[...],
                            preferred_element_type=jnp.float32)

    @pl.when(k == pl.num_programs(1) - 1)
    def _():
        bias = p_ref[0:1, :].astype(jnp.float32)
        gamma = p_ref[1:2, :].astype(jnp.float32)
        beta = p_ref[2:3, :].astype(jnp.float32)

        h = acc_ref[...] + bias  # padded columns are exactly 0 (zero W cols, zero bias)

        inv_n = jnp.float32(1.0 / out_dim)            # compile-time constant
        mean = jnp.sum(h, axis=-1, keepdims=True) * inv_n
        centered = h - mean
        if out_pad != out_dim:
            # Exclude padded feature columns from the variance.
            mask = jax.lax.broadcasted_iota(jnp.int32, (1, out_pad), 1) < out_dim
            centered = jnp.where(mask, centered, 0.0)
        var = jnp.sum(centered * centered, axis=-1, keepdims=True) * inv_n
        hn = centered * jax.lax.rsqrt(var + eps)      # rsqrt -> EUP slot

        y = hn * gamma + beta
        o_ref[...] = jnp.maximum(y, 0.0).astype(o_ref.dtype)


def _vmem_estimate(m_tile, k_tile, out_pad, x_bytes, w_bytes, o_bytes):
    # double-buffered x / w / out tiles + f32 accumulator scratch
    return (2 * m_tile * k_tile * x_bytes
            + 2 * k_tile * out_pad * w_bytes
            + 2 * m_tile * out_pad * o_bytes
            + m_tile * out_pad * 4)


def fc_layer(x, weight, bias, gamma, beta, *, eps=1e-5, tm=256, tk=512):
    """FCLayer forward: ReLU(LayerNorm(x @ W.T + b)).

    x:      [..., in_dim]
    weight: [out_dim, in_dim]   (PyTorch nn.Linear layout)
    bias:   [out_dim]
    gamma:  [out_dim]           (LayerNorm weight)
    beta:   [out_dim]           (LayerNorm bias)
    returns [..., out_dim]
    """
    assert tm % 8 == 0 and tk % 128 == 0
    in_dim = x.shape[-1]
    out_dim = weight.shape[0]
    lead = x.shape[:-1]

    x2 = x.reshape(-1, in_dim)
    n = x2.shape[0]

    # ---- tile / padding choices -------------------------------------------
    out_pad = _round_up(out_dim, 128)            # lane-dense output, untiled
    k_tile = min(tk, _round_up(in_dim, 128))     # K streamed through accumulator
    m_tile = min(tm, _round_up(n, 8))            # big row tile, but not > needed

    # Keep the working set inside a conservative budget (v7x has only 64 MiB).
    budget = 48 * 1024 * 1024
    xb, wb, ob = x.dtype.itemsize, weight.dtype.itemsize, x.dtype.itemsize
    while _vmem_estimate(m_tile, k_tile, out_pad, xb, wb, ob) > budget:
        if k_tile > 128:
            k_tile = max(128, _round_up(k_tile // 2, 128))
        elif m_tile > 8:
            m_tile = max(8, _round_up(m_tile // 2, 8))
        else:
            break
    # TODO(synk): out_dim itself is untiled (LayerNorm needs the full feature
    # row); an extremely wide out_dim would need a two-pass normalization.

    k_pad = _round_up(in_dim, k_tile)
    m_pad = _round_up(n, m_tile)

    # ---- pad operands (zeros are exact no-ops for the matmul/statistics) ---
    x2p = jnp.pad(x2, ((0, m_pad - n), (0, k_pad - in_dim)))
    w_p = jnp.pad(weight.T, ((0, k_pad - in_dim), (0, out_pad - out_dim)))
    params = jnp.pad(jnp.stack([bias, gamma, beta], axis=0),
                     ((0, 0), (0, out_pad - out_dim)))

    kernel = functools.partial(_fc_layer_kernel, eps=eps,
                               out_dim=out_dim, out_pad=out_pad)

    out = pl.pallas_call(
        kernel,
        out_shape=jax.ShapeDtypeStruct((m_pad, out_pad), x.dtype),
        grid_spec=pltpu.PrefetchScalarGridSpec(
            num_scalar_prefetch=0,
            grid=(m_pad // m_tile, k_pad // k_tile),
            in_specs=[
                pl.BlockSpec((m_tile, k_tile), lambda i, k: (i, k)),
                pl.BlockSpec((k_tile, out_pad), lambda i, k: (k, 0)),
                pl.BlockSpec((3, out_pad), lambda i, k: (0, 0)),
            ],
            out_specs=pl.BlockSpec((m_tile, out_pad), lambda i, k: (i, 0)),
            scratch_shapes=[pltpu.VMEM((m_tile, out_pad), jnp.float32)],
        ),
        compiler_params=pltpu.CompilerParams(
            dimension_semantics=("parallel", "arbitrary"),
            vmem_limit_bytes=64 * 1024 * 1024,
        ),
    )(x2p, w_p, params)

    return out[:n, :out_dim].reshape(*lead, out_dim)


def _reference(x, weight, bias, gamma, beta, eps=1e-5):
    h = jnp.einsum("...i,oi->...o", x, weight) + bias
    mean = jnp.mean(h, axis=-1, keepdims=True)
    var = jnp.mean((h - mean) ** 2, axis=-1, keepdims=True)
    hn = (h - mean) / jnp.sqrt(var + eps)
    return jnp.maximum(hn * gamma + beta, 0.0)


if __name__ == "__main__":
    key = jax.random.PRNGKey(0)
    k_x, k_w, k_b = jax.random.split(key, 3)

    batch, seq, in_dim, out_dim = 2, 8, 32, 32

    x = jax.random.normal(k_x, (batch, seq, in_dim), dtype=jnp.float32)

    # Deterministic parameter init (shapes per nn.Linear / nn.LayerNorm).
    bound = 1.0 / (in_dim ** 0.5)
    weight = jax.random.uniform(k_w, (out_dim, in_dim), jnp.float32, -bound, bound)
    bias = jax.random.uniform(k_b, (out_dim,), jnp.float32, -bound, bound)
    gamma = jnp.ones((out_dim,), jnp.float32)   # LayerNorm weight
    beta = jnp.zeros((out_dim,), jnp.float32)   # LayerNorm bias

    out = fc_layer(x, weight, bias, gamma, beta)
    out = jax.block_until_ready(out)

    ref = _reference(x, weight, bias, gamma, beta)
    assert out.shape == (batch, seq, out_dim)
    assert jnp.allclose(out, ref, atol=1e-5, rtol=1e-5)

    # Also exercise a padded / multi-tile path (rows not a tile multiple,
    # in_dim > one K tile would go here for bigger shapes).
    x2 = jax.random.normal(k_x, (3, 5, in_dim), dtype=jnp.float32)
    out2 = jax.block_until_ready(fc_layer(x2, weight, bias, gamma, beta))
    ref2 = _reference(x2, weight, bias, gamma, beta)
    assert out2.shape == (3, 5, out_dim)
    assert jnp.allclose(out2, ref2, atol=1e-5, rtol=1e-5)

    print("KERNEL_OK")
</pallas_src>

<mosaic_0001>
module attributes {stable_mosaic.version = 11 : i64} {
  func.func @_fc_layer_kernel(%arg0: i32, %arg1: i32, %arg2: memref<16x128xf32, #tpu.memory_space<vmem>>, %arg3: memref<128x128xf32, #tpu.memory_space<vmem>>, %arg4: memref<3x128xf32, #tpu.memory_space<vmem>>, %arg5: memref<16x128xf32, #tpu.memory_space<vmem>>, %arg6: memref<16x128xf32, #tpu.memory_space<vmem>>) attributes {dimension_semantics = [#tpu.dimension_semantics<parallel>, #tpu.dimension_semantics<arbitrary>], iteration_bounds = array<i64: 1, 1>, scalar_prefetch = 0 : i64, scratch_operands = 1 : i64, tpu.core_type = #tpu.core_type<tc>, window_params = [{transform_indices = @transform_0, window_bounds = array<i64: 16, 128>}, {transform_indices = @transform_1, window_bounds = array<i64: 128, 128>}, {pipeline_mode = #tpu.pipeline_mode<synchronous>, transform_indices = @transform_2, window_bounds = array<i64: 3, 128>}, {transform_indices = @transform_3, window_bounds = array<i64: 16, 128>}]} {
    %c0_i32 = arith.constant 0 : i32
    %0 = arith.cmpi eq, %arg1, %c0_i32 : i32
    %1 = arith.extui %0 : i1 to i32
    %c0_i32_0 = arith.constant 0 : i32
    %2 = arith.cmpi ne, %1, %c0_i32_0 : i32
    scf.if %2 {
      %cst_10 = arith.constant 0.000000e+00 : f32
      %12 = vector.broadcast %cst_10 : f32 to vector<16x128xf32>
      %c0_11 = arith.constant 0 : index
      %c0_12 = arith.constant 0 : index
      %13 = vector.load %arg6[%c0_11, %c0_12] : memref<16x128xf32, #tpu.memory_space<vmem>>, vector<16x128xf32>
      tpu.vector_store %arg6[%c0_11, %c0_12], %12 {strides = array<i32>} : memref<16x128xf32, #tpu.memory_space<vmem>>, vector<16x128xf32>,
    } else {
    }
    %c0 = arith.constant 0 : index
    %c0_1 = arith.constant 0 : index
    %3 = vector.load %arg6[%c0, %c0_1] : memref<16x128xf32, #tpu.memory_space<vmem>>, vector<16x128xf32>
    %c0_2 = arith.constant 0 : index
    %c0_3 = arith.constant 0 : index
    %4 = vector.load %arg2[%c0_2, %c0_3] : memref<16x128xf32, #tpu.memory_space<vmem>>, vector<16x128xf32>
    %c0_4 = arith.constant 0 : index
    %c0_5 = arith.constant 0 : index
    %5 = vector.load %arg3[%c0_4, %c0_5] : memref<128x128xf32, #tpu.memory_space<vmem>>, vector<128x128xf32>
    %cst = arith.constant dense<0.000000e+00> : vector<16x128xf32>
    %6 = tpu.matmul %4, %5, %cst {dimension_numbers = #tpu.dot_dimension_numbers<[1], [0], [0], [1], [0, 0, 1, 1], [], []>} : vector<16x128xf32>, vector<128x128xf32>, vector<16x128xf32> -> vector<16x128xf32>
    %7 = arith.addf %3, %6 : vector<16x128xf32>
    %c0_6 = arith.constant 0 : index
    %c0_7 = arith.constant 0 : index
    %8 = vector.load %arg6[%c0_6, %c0_7] : memref<16x128xf32, #tpu.memory_space<vmem>>, vector<16x128xf32>
    tpu.vector_store %arg6[%c0_6, %c0_7], %7 {strides = array<i32>} : memref<16x128xf32, #tpu.memory_space<vmem>>, vector<16x128xf32>,
    %c0_i32_8 = arith.constant 0 : i32
    %9 = arith.cmpi eq, %arg1, %c0_i32_8 : i32
    %10 = arith.extui %9 : i1 to i32
    %c0_i32_9 = arith.constant 0 : i32
    %11 = arith.cmpi ne, %10, %c0_i32_9 : i32
    scf.if %11 {
      %c0_10 = arith.constant 0 : index
      %c0_11 = arith.constant 0 : index
      %12 = vector.load %arg4[%c0_10, %c0_11] : memref<3x128xf32, #tpu.memory_space<vmem>>, vector<1x128xf32>
      %c1 = arith.constant 1 : index
      %c0_12 = arith.constant 0 : index
      %13 = vector.load %arg4[%c1, %c0_12] : memref<3x128xf32, #tpu.memory_space<vmem>>, vector<1x128xf32>
      %c2 = arith.constant 2 : index
      %c0_13 = arith.constant 0 : index
      %14 = vector.load %arg4[%c2, %c0_13] : memref<3x128xf32, #tpu.memory_space<vmem>>, vector<1x128xf32>
      %c0_14 = arith.constant 0 : index
      %c0_15 = arith.constant 0 : index
      %15 = vector.load %arg6[%c0_14, %c0_15] : memref<16x128xf32, #tpu.memory_space<vmem>>, vector<16x128xf32>
      %16 = vector.broadcast %12 : vector<1x128xf32> to vector<16x128xf32>
      %17 = arith.addf %15, %16 : vector<16x128xf32>
      %cst_16 = arith.constant dense<0.000000e+00> : vector<16xf32>
      %18 = vector.multi_reduction <add>, %17, %cst_16 [1] : vector<16x128xf32> to vector<16xf32>
      %19 = vector.shape_cast %18 : vector<16xf32> to vector<16x1xf32>
      %cst_17 = arith.constant 3.125000e-02 : f32
      %20 = vector.broadcast %cst_17 : f32 to vector<16x1xf32>
      %21 = arith.mulf %19, %20 : vector<16x1xf32>
      %22 = vector.broadcast %21 : vector<16x1xf32> to vector<16x128xf32>
      %23 = arith.subf %17, %22 : vector<16x128xf32>
      %24 = tpu.iota {dimensions = array<i32: 1>} : vector<1x128xi32>
      %c32_i32 = arith.constant 32 : i32
      %25 = vector.broadcast %c32_i32 : i32 to vector<1x128xi32>
      %26 = arith.cmpi slt, %24, %25 : vector<1x128xi32>
      %cst_18 = arith.constant 0.000000e+00 : f32
      %27 = vector.shape_cast %26 : vector<1x128xi1> to vector<1x128xi1>
      %28 = vector.broadcast %27 : vector<1x128xi1> to vector<16x128xi1>
      %29 = vector.broadcast %cst_18 : f32 to vector<16x128xf32>
      %30 = arith.select %28, %23, %29 : vector<16x128xi1>, vector<16x128xf32>
      %31 = arith.mulf %30, %30 : vector<16x128xf32>
      %cst_19 = arith.constant dense<0.000000e+00> : vector<16xf32>
      %32 = vector.multi_reduction <add>, %31, %cst_19 [1] : vector<16x128xf32> to vector<16xf32>
      %33 = vector.shape_cast %32 : vector<16xf32> to vector<16x1xf32>
      %cst_20 = arith.constant 3.125000e-02 : f32
      %34 = vector.broadcast %cst_20 : f32 to vector<16x1xf32>
      %35 = arith.mulf %33, %34 : vector<16x1xf32>
      %cst_21 = arith.constant 9.99999974E-6 : f32
      %36 = vector.broadcast %cst_21 : f32 to vector<16x1xf32>
      %37 = arith.addf %35, %36 : vector<16x1xf32>
      %38 = math.rsqrt %37 : vector<16x1xf32>
      %39 = vector.broadcast %38 : vector<16x1xf32> to vector<16x128xf32>
      %40 = arith.mulf %30, %39 : vector<16x128xf32>
      %41 = vector.broadcast %13 : vector<1x128xf32> to vector<16x128xf32>
      %42 = arith.mulf %40, %41 : vector<16x128xf32>
      %43 = vector.broadcast %14 : vector<1x128xf32> to vector<16x128xf32>
      %44 = arith.addf %42, %43 : vector<16x128xf32>
      %cst_22 = arith.constant 0.000000e+00 : f32
      %45 = vector.broadcast %cst_22 : f32 to vector<16x128xf32>
      %46 = arith.maximumf %44, %45 : vector<16x128xf32>
      %c0_23 = arith.constant 0 : index
      %c0_24 = arith.constant 0 : index
      %47 = vector.load %arg5[%c0_23, %c0_24] : memref<16x128xf32, #tpu.memory_space<vmem>>, vector<16x128xf32>
      tpu.vector_store %arg5[%c0_23, %c0_24], %46 {strides = array<i32>} : memref<16x128xf32, #tpu.memory_space<vmem>>, vector<16x128xf32>,
    } else {
    }
    return
  }
  func.func @transform_0(%arg0: i32, %arg1: i32) -> (i32, i32) {
    %c0_i32 = arith.constant 0 : i32
    return %arg0, %arg1 : i32, i32
  }
  func.func @transform_1(%arg0: i32, %arg1: i32) -> (i32, i32) {
    %c0_i32 = arith.constant 0 : i32
    %c0_i32_0 = arith.constant 0 : i32
    return %arg1, %c0_i32 : i32, i32
  }
  func.func @transform_2(%arg0: i32, %arg1: i32) -> (i32, i32) {
    %c0_i32 = arith.constant 0 : i32
    %c0_i32_0 = arith.constant 0 : i32
    %c0_i32_1 = arith.constant 0 : i32
    return %c0_i32, %c0_i32_0 : i32, i32
  }
  func.func @transform_3(%arg0: i32, %arg1: i32) -> (i32, i32) {
    %c0_i32 = arith.constant 0 : i32
    %c0_i32_0 = arith.constant 0 : i32
    return %arg0, %c0_i32 : i32, i32
  }
}

</mosaic_0001>

<llo_original>
// kernel: tpu_custom_call.1
$region0: #{tpu_custom_call.1}
  #allocation0 [shape = 'u32[]', space=smem, size = 0x4, offset = 0x4, fixed_abs, tag = 'smem constant byte address 0x4 - core index']
  #allocation1 [shape = 'u32[144,128]{1,0:T(1,128)}', space=vmem, size = 0x12000, scoped, tag = 'internal scratch']
  #allocation2 [shape = 'f32[16,128]{1,0:T(8,128)}', space=vmem, size = 0x2000, scoped, tag = 'scratch operand']
  %s0 = inlined_call_operand.hbm [shape: f32[16,128], index: 0, kind: input, shape index: {}]
  %s1 = inlined_call_operand.hbm [shape: f32[128,128], index: 1, kind: input, shape index: {}]
  %s2 = inlined_call_operand.hbm [shape: f32[3,128], index: 2, kind: input, shape index: {}]
  %s3 = inlined_call_operand.hbm [shape: f32[16,128], index: 3, kind: output, shape index: {}]
  %s4 = sld [smem:[#allocation0]]
  $region42: #{tpu_custom_call.1} parent=0
    _
  %s6 = ssub.s32 1, %s4
  %s7 = scalar_select 0, %s6, %s4
  $region1: #{tpu_custom_call.1} parent=0
    #allocation3 [shape = 'u8[8192]{0}', space=vmem, size = 0x2000, scoped, tag = 'input window, operand 0, single buffered']
    #allocation4 [shape = 's32[1]{0}', space=sflag, size = 0x4, scoped, tag = 'scoped memory for tpu_custom_call.1']
    #allocation5 [shape = 's32[1]{0}', space=sflag, size = 0x4, scoped, tag = 'scoped memory for tpu_custom_call.1']
    #allocation6 [shape = 'u8[65536]{0}', space=vmem, size = 0x10000, scoped, tag = 'input window, operand 1, single buffered']
    #allocation7 [shape = 's32[1]{0}', space=sflag, size = 0x4, scoped, tag = 'scoped memory for tpu_custom_call.1']
    #allocation8 [shape = 'u8[2048]{0}', space=vmem, size = 0x800, scoped, tag = 'input window, operand 2, single buffered']
    #allocation9 [shape = 'u8[8192]{0}', space=vmem, size = 0x2000, scoped, tag = 'output window, operand 0, single buffered']
    %8 = vsyncpa [#allocation4], 0
    %9 = vsyncpa [#allocation7], 0
    %10 = vsyncpa [#allocation5], 0
    // Predicated region
    $region2: #{tpu_custom_call.1} parent=1 // pred_check
      _
    $region3: #{tpu_custom_call.1} parent=1 // pred_check_branch
      %12 = sbr.rel (0) target = $region5
    $region4: #{tpu_custom_call.1} parent=1 // pred_region
      %s14 = ssub.s32 256, 256
      %15 = vsyncadd [#allocation4], %s14
      %s16 = sshll.u32 [#allocation3], 4
      %s17 = int_to_ptr.vmem [resolvable:$true] %s16
      %22 = dma.hbm_to_vmem [thread:$0]  %s0, 256, %s17, [#allocation4], 128, 128, 8
    $region5: #{tpu_custom_call.1} parent=1 // pred_fallthru
      _
    // Predicated region
    $region6: #{tpu_custom_call.1} parent=1 // pred_check
      _
    $region7: #{tpu_custom_call.1} parent=1 // pred_check_branch
      %24 = sbr.rel (0) target = $region9
    $region8: #{tpu_custom_call.1} parent=1 // pred_region
      %s26 = ssub.s32 2048, 2048
      %27 = vsyncadd [#allocation7], %s26
      %s28 = sshll.u32 [#allocation6], 4
      %s29 = int_to_ptr.vmem [resolvable:$true] %s28
      %34 = dma.hbm_to_vmem [thread:$0]  %s1, 2048, %s29, [#allocation7], 128, 128, 8
    $region9: #{tpu_custom_call.1} parent=1 // pred_fallthru
      _
    // Predicated region
    $region10: #{tpu_custom_call.1} parent=1 // pred_check
      _
    $region11: #{tpu_custom_call.1} parent=1 // pred_check_branch
      %36 = sbr.rel (0) target = $region13
    $region12: #{tpu_custom_call.1} parent=1 // pred_region
      %s38 = ssub.s32 64, 64
      %39 = vsyncadd [#allocation7], %s38
      %s41 = sshll.u32 [#allocation8], 4
      %s42 = int_to_ptr.vmem [resolvable:$true] %s41
      %44 = dma.hbm_to_vmem [thread:$0]  %s2, 64, %s42, [#allocation7]
    $region13: #{tpu_custom_call.1} parent=1 // pred_fallthru
      _
    // Predicated region
    $region14: #{tpu_custom_call.1} parent=1 // pred_check
      _
    $region15: #{tpu_custom_call.1} parent=1 // pred_check_branch
      %46 = sbr.rel (0) target = $region17
    $region16: #{tpu_custom_call.1} parent=1 // pred_region
      %47 = dma.done [#allocation4], 256
    $region17: #{tpu_custom_call.1} parent=1 // pred_fallthru
      _
    // Predicated region
    $region18: #{tpu_custom_call.1} parent=1 // pred_check
      _
    $region19: #{tpu_custom_call.1} parent=1 // pred_check_branch
      %49 = sbr.rel (0) target = $region21
    $region20: #{tpu_custom_call.1} parent=1 // pred_region
      %50 = dma.done [#allocation7], 2048
    $region21: #{tpu_custom_call.1} parent=1 // pred_fallthru
      _
    // Predicated region
    $region22: #{tpu_custom_call.1} parent=1 // pred_check
      _
    $region23: #{tpu_custom_call.1} parent=1 // pred_check_branch
      %52 = sbr.rel (0) target = $region25
    $region24: #{tpu_custom_call.1} parent=1 // pred_region
      %53 = dma.done [#allocation7], 64
    $region25: #{tpu_custom_call.1} parent=1 // pred_fallthru
      _
    %p54 = scmp.eq.s32.totalorder 0, 0
    // Predicated region
    $region26: #{tpu_custom_call.1} parent=1 // pred_check
      %p55 = pneg %p54
    $region27: #{tpu_custom_call.1} parent=1 // pred_check_branch
      %57 = sbr.rel (%p55) target = $region29
    $region28: #{tpu_custom_call.1} parent=1 // pred_region
      %58 = vst [vmem:[#allocation2] sm:$0xff] 0.0
      %59 = vst [vmem:[#allocation2 + $0x8] sm:$0xff] 0.0
    $region29: #{tpu_custom_call.1} parent=1 // pred_fallthru
      _
    %v60 = vld [vmem:[#allocation2] sm:$0xff]
    %v61 = vld [vmem:[#allocation2 + $0x8] sm:$0xff]
    %v62 = vld [vmem:[#allocation3] sm:$0xff]
    %v63 = vld [vmem:[#allocation3 + $0x8] sm:$0xff]
    %v64 = vld [vmem:[#allocation6] sm:$0xff]
    %v65 = vld [vmem:[#allocation6 + $0x8] sm:$0xff]
    %v66 = vld [vmem:[#allocation6 + $0x10] sm:$0xff]
    %v67 = vld [vmem:[#allocation6 + $0x18] sm:$0xff]
    %v68 = vld [vmem:[#allocation6 + $0x20] sm:$0xff]
    %v69 = vld [vmem:[#allocation6 + $0x28] sm:$0xff]
    %v70 = vld [vmem:[#allocation6 + $0x30] sm:$0xff]
    %v71 = vld [vmem:[#allocation6 + $0x38] sm:$0xff]
    %v72 = vld [vmem:[#allocation6 + $0x40] sm:$0xff]
    %v73 = vld [vmem:[#allocation6 + $0x48] sm:$0xff]
    %v74 = vld [vmem:[#allocation6 + $0x50] sm:$0xff]
    %v75 = vld [vmem:[#allocation6 + $0x58] sm:$0xff]
    %v76 = vld [vmem:[#allocation6 + $0x60] sm:$0xff]
    %v77 = vld [vmem:[#allocation6 + $0x68] sm:$0xff]
    %v78 = vld [vmem:[#allocation6 + $0x70] sm:$0xff]
    %v79 = vld [vmem:[#allocation6 + $0x78] sm:$0xff]
    %80 = vmatprep.subr.mxu0 0.0
    %81 = vmatpush1.msra.mxu0 %v64
    %82 = vmatprep.subr.mxu0 0.0
    %83 = vmatpush1.msra.mxu0 %v65
    %84 = vmatprep.subr.mxu0 0.0
    %85 = vmatpush1.msra.mxu0 %v66
    %86 = vmatprep.subr.mxu0 0.0
    %87 = vmatpush1.msra.mxu0 %v67
    %88 = vmatprep.subr.mxu0 0.0
    %89 = vmatpush1.msra.mxu0 %v68
    %90 = vmatprep.subr.mxu0 0.0
    %91 = vmatpush1.msra.mxu0 %v69
    %92 = vmatprep.subr.mxu0 0.0
    %93 = vmatpush1.msra.mxu0 %v70
    %94 = vmatprep.subr.mxu0 0.0
    %95 = vmatpush1.msra.mxu0 %v71
    %96 = vmatprep.subr.mxu0 0.0
    %97 = vmatpush1.msra.mxu0 %v72
    %98 = vmatprep.subr.mxu0 0.0
    %99 = vmatpush1.msra.mxu0 %v73
    %100 = vmatprep.subr.mxu0 0.0
    %101 = vmatpush1.msra.mxu0 %v74
    %102 = vmatprep.subr.mxu0 0.0
    %103 = vmatpush1.msra.mxu0 %v75
    %104 = vmatprep.subr.mxu0 0.0
    %105 = vmatpush1.msra.mxu0 %v76
    %106 = vmatprep.subr.mxu0 0.0
    %107 = vmatpush1.msra.mxu0 %v77
    %108 = vmatprep.subr.mxu0 0.0
    %109 = vmatpush1.msra.mxu0 %v78
    %110 = vmatprep.subr.mxu0 0.0
    %111 = vmatpush1.msra.mxu0 %v79
    %112 = vmatprep.subr.mxu0 0.0
    %113 = vmatpush1.msra.mxu0 0.0
    %114 = vmatprep.subr.mxu0 0.0
    %115 = vmatpush1.msra.mxu0 0.0
    %116 = vmatprep.subr.mxu0 0.0
    %117 = vmatpush1.msra.mxu0 0.0
    %118 = vmatprep.subr.mxu0 0.0
    %119 = vmatpush1.msra.mxu0 0.0
    %120 = vmatprep.subr.mxu0 0.0
    %121 = vmatpush1.msra.mxu0 0.0
    %122 = vmatprep.subr.mxu0 0.0
    %123 = vmatpush1.msra.mxu0 0.0
    %124 = vmatprep.subr.mxu0 0.0
    %125 = vmatpush1.msra.mxu0 0.0
    %126 = vmatprep.subr.mxu0 0.0
    %127 = vmatpush1.msra.mxu0 0.0
    %128 = vmatprep.subr.mxu0 0.0
    %129 = vmatpush1.msra.mxu0 0.0
    %130 = vmatprep.subr.mxu0 0.0
    %131 = vmatpush1.msra.mxu0 0.0
    %132 = vmatprep.subr.mxu0 0.0
    %133 = vmatpush1.msra.mxu0 0.0
    %134 = vmatprep.subr.mxu0 0.0
    %135 = vmatpush1.msra.mxu0 0.0
    %136 = vmatprep.subr.mxu0 0.0
    %137 = vmatpush1.msra.mxu0 0.0
    %138 = vmatprep.subr.mxu0 0.0
    %139 = vmatpush1.msra.mxu0 0.0
    %140 = vmatprep.subr.mxu0 0.0
    %141 = vmatpush1.msra.mxu0 0.0
    %142 = vmatprep.subr.mxu0 0.0
    %143 = vmatpush1.msra.mxu0 0.0
    %144 = vmatprep.mubr.f32.mxu0 0.0
    %145 = vmatmul.mubr.f32.gmra.mrb[0].mxu0 %v62
    %v146 = vpop.f32.mrb[0].mxu0
    %v147 = vadd.f32 0.0, %v146
    %v148 = vpop.f32.mrb[0].mxu0
    %149 = vmatprep.mubr.f32.mxu0 0.0
    %150 = vmatmul.mubr.f32.gmra.mrb[0].mxu0 %v63
    %v151 = vpop.f32.mrb[0].mxu0
    %v152 = vadd.f32 0.0, %v151
    %v153 = vpop.f32.mrb[0].mxu0
    %154 = vdwg.mxu0
    %v155 = vadd.f32 %v60, %v147
    %v156 = vadd.f32 %v61, %v152
    %157 = vst [vmem:[#allocation2] sm:$0xff] %v155
    %158 = vst [vmem:[#allocation2 + $0x8] sm:$0xff] %v156
    // Predicated region
    $region30: #{tpu_custom_call.1} parent=1 // pred_check
      %p159 = pneg %p54
    $region31: #{tpu_custom_call.1} parent=1 // pred_check_branch
      %161 = sbr.rel (%p159) target = $region33
    $region32: #{tpu_custom_call.1} parent=1 // pred_region
      %v162 = vld [vmem:[#allocation8] sm:$0x1]
      %v163 = vld [vmem:[#allocation8 + $0x1] sm:$0x1]
      %v164 = vld [vmem:[#allocation8 + $0x2] sm:$0x1]
      %v165 = vld [vmem:[#allocation2] sm:$0xff]
      %v166 = vld [vmem:[#allocation2 + $0x8] sm:$0xff]
      %v167 = vlaneseq
      %v168 = vshrl.u32 %v167, 7
      %v169 = vsub.s32 0, %v168
      %v170 = vrot.slane %v162, %v169
      %v171 = vadd.f32 %v165, %v170
      %v172 = vadd.f32 %v166, %v170
      %173 = vadd.xlane.f32.xlu0 %v171
      %v174 = vpop.xlane.xlu0 %173
      %175 = vadd.xlane.f32.xlu0 %v172
      %v176 = vpop.xlane.xlu0 %175
      %v177 = vmul.f32 %v174, 0.03125
      %v178 = vmul.f32 %v176, 0.03125
      %v179 = vsub.f32 %v171, %v177
      %v180 = vsub.f32 %v172, %v178
      %v181 = vlaneseq
      %v182 = vand.u32 %v181, 127
      %vm183 = vcmp.lt.s32.totalorder %v182, 32
      %v184 = vsel %vm183, 1, 0
      %vm185 = vcmp.eq.s32.totalorder %v184, 1
      %v186 = vsel %vm185, %v179, 0.0
      %v187 = vsel %vm185, %v180, 0.0
      %v188 = vmul.f32 %v186, %v186
      %v189 = vmul.f32 %v187, %v187
      %190 = vadd.xlane.f32.xlu0 %v188
      %v191 = vpop.xlane.xlu0 %190
      %192 = vadd.xlane.f32.xlu0 %v189
      %v193 = vpop.xlane.xlu0 %192
      %v194 = vmul.f32 %v191, 0.03125
      %v195 = vmul.f32 %v193, 0.03125
      %v196 = vadd.f32 %v194, 1e-05
      %v197 = vadd.f32 %v195, 1e-05
      %v198 = vrsqrt.pop %v196
      %v199 = vrsqrt.pop %v197
      %v200 = vmul.f32 %v186, %v198
      %v201 = vmul.f32 %v187, %v199
      %v202 = vlaneseq
      %v203 = vshrl.u32 %v202, 7
      %v204 = vsub.s32 0, %v203
      %v205 = vrot.slane %v163, %v204
      %v206 = vmul.f32 %v200, %v205
      %v207 = vmul.f32 %v201, %v205
      %v208 = vlaneseq
      %v209 = vshrl.u32 %v208, 7
      %v210 = vsub.s32 0, %v209
      %v211 = vrot.slane %v164, %v210
      %v212 = vadd.f32 %v206, %v211
      %v213 = vadd.f32 %v207, %v211
      %v214 = vmax.f32 %v212, 0.0
      %v215 = vmax.f32 %v213, 0.0
      %216 = vst [vmem:[#allocation9] sm:$0xff] %v214
      %217 = vst [vmem:[#allocation9 + $0x8] sm:$0xff] %v215
    $region33: #{tpu_custom_call.1} parent=1 // pred_fallthru
      _
    // Predicated region
    $region34: #{tpu_custom_call.1} parent=1 // pred_check
      _
    $region35: #{tpu_custom_call.1} parent=1 // pred_check_branch
      %219 = sbr.rel (0) target = $region37
    $region36: #{tpu_custom_call.1} parent=1 // pred_region
      %s221 = ssub.s32 256, 256
      %222 = vsyncadd [#allocation5], %s221
      %s223 = sshll.u32 [#allocation9], 4
      %s224 = int_to_ptr.vmem [resolvable:$true] %s223
      %229 = dma.vmem_to_hbm [thread:$0]  %s224, 256, %s3, [#allocation5], 128, 128, 8
    $region37: #{tpu_custom_call.1} parent=1 // pred_fallthru
      _
    // Predicated region
    $region38: #{tpu_custom_call.1} parent=1 // pred_check
      _
    $region39: #{tpu_custom_call.1} parent=1 // pred_check_branch
      %231 = sbr.rel (0) target = $region41
    $region40: #{tpu_custom_call.1} parent=1 // pred_region
      %232 = dma.done [#allocation5], 256
    $region41: #{tpu_custom_call.1} parent=1 // pred_fallthru
      _
    %233 = vsyncpa [#allocation4], 1
    %234 = vsyncpa [#allocation7], 1
    %235 = vsyncpa [#allocation5], 1

</llo_original>
